<compile_context>
chip_gen: v5e
topology: v5e:2x2
jax: 0.10.0
libtpu: 0.0.40
codegen_flags: <defaults>
</compile_context>

<pallas_src>
import functools
import math

import jax
import jax.numpy as jnp
from jax.experimental import pallas as pl
from jax.experimental.pallas import tpu as pltpu


def _cdiv(a, b):
    return -(-a // b)


def _rope_cache_kernel(scale_ref, phase_ref, cos_ref, sin_ref, *, out_dtype):
    """Compute one tile of the rotary cos/sin cache.

    scale_ref : (1, lane_width)  host-precomputed  ppr * inv_freq_cat[lane % dim]
    phase_ref : (1, lane_width)  host-precomputed  (lane // dim) * inv_freq_cat[lane % dim]
    cos_ref   : (row_tile, lane_width) output cos tile
    sin_ref   : (row_tile, lane_width) output sin tile

    Packed layout: each output row holds ppr = lane_width // dim consecutive
    positions; position = global_row * ppr + lane // dim and the frequency
    index is lane % dim.  Both are folded into scale/phase on the host, so the
    in-kernel math is just  angle = row * scale + phase.
    """
    i = pl.program_id(0)
    rows = cos_ref.shape[0]

    # [rows, 1] global row index column: iota + scalar add + f32 convert run on
    # a single lane (128x cheaper than full-tile index math).
    row = (jax.lax.broadcasted_iota(jnp.int32, (rows, 1), 0) + i * rows)
    row = row.astype(jnp.float32)

    # Outer product via broadcast on the VPU (do NOT turn this into a K=1
    # matmul; the MXU would waste its contraction depth for zero benefit).
    angle = row * scale_ref[...] + phase_ref[...]

    # NOTE: the final (partial) grid block may compute angles for packed rows
    # beyond total_rows; Pallas clips the writeback so this is benign.
    cos_ref[...] = jnp.cos(angle).astype(out_dtype)
    sin_ref[...] = jnp.sin(angle).astype(out_dtype)


def _pick_row_tile(total_rows, lane_width, elem_bytes=4):
    """Pick the sublane (row) tile size for the cache slab.

    Budget: 2 outputs x 2 pipeline buffers x row_tile x lane_width x 4 B kept
    under ~8 MiB (plenty of headroom even against v7x's 64 MiB physical VMEM /
    32 MiB scoped default), with a 1024-row cap (pipeline efficiency saturates
    around 512-1024-row f32 tiles).  When there is enough work, split into
    >= 4 grid steps so v7x's two TensorCores each get >= 2 steps and the
    output writeback DMA is pipelined behind compute.
    """
    budget_rows = max(8, (8 << 20) // (2 * 2 * lane_width * elem_bytes))
    tile = min(total_rows, budget_rows, 1024)
    if total_rows >= 4 * 8:
        tile = min(tile, _cdiv(total_rows, 4))
    if tile < total_rows:
        tile = max(8, (tile // 8) * 8)  # sublane multiple for non-full blocks
    return tile


def build_rope_cache(dim, max_position_embeddings, base=10000.0,
                     out_dtype=jnp.float32):
    """Build cos/sin caches of shape (1, 1, max_position_embeddings, dim)."""
    assert dim % 2 == 0, "rotary dim must be even"
    max_pos = int(max_position_embeddings)

    # Same construction as PyTorch: inv_freq = 1/base**(arange(0,dim,2)/dim),
    # emb = cat(freqs, freqs) -> per-lane frequency vector concat(inv_freq, inv_freq).
    inv_freq = 1.0 / (base ** (jnp.arange(0, dim, 2, dtype=jnp.float32) / dim))
    inv_freq_cat = jnp.concatenate([inv_freq, inv_freq], axis=0)  # (dim,)

    # Lane-dense packing width: smallest common multiple of dim and 128 so
    # every output store is a full, unmasked 128-lane write (works for
    # dim = 32, 80, 96, 192, ...).  ppr positions are packed per output row.
    lane_width = math.lcm(dim, 128)
    if lane_width > 4096:  # pathological dims: fall back to width = dim
        lane_width = dim
    ppr = lane_width // dim
    total_elems = max_pos * dim
    total_rows = _cdiv(total_elems, lane_width)

    # Host-precomputed per-lane constants:
    #   pos(row, lane)  = row * ppr + lane // dim
    #   angle(row,lane) = pos * inv_freq_cat[lane % dim]
    #                   = row * scale[lane] + phase[lane]
    lane_idx = jnp.arange(lane_width)
    inv_lane = inv_freq_cat[lane_idx % dim].astype(jnp.float32)
    scale = (jnp.float32(ppr) * inv_lane)[None, :]                       # (1, W)
    phase = ((lane_idx // dim).astype(jnp.float32) * inv_lane)[None, :]  # (1, W)

    row_tile = _pick_row_tile(total_rows, lane_width)
    grid = (_cdiv(total_rows, row_tile),)

    kernel = functools.partial(_rope_cache_kernel, out_dtype=out_dtype)

    cos2d, sin2d = pl.pallas_call(
        kernel,
        out_shape=(
            jax.ShapeDtypeStruct((total_rows, lane_width), out_dtype),
            jax.ShapeDtypeStruct((total_rows, lane_width), out_dtype),
        ),
        grid_spec=pltpu.PrefetchScalarGridSpec(
            num_scalar_prefetch=0,
            grid=grid,
            in_specs=[
                pl.BlockSpec((1, lane_width), lambda i: (0, 0)),
                pl.BlockSpec((1, lane_width), lambda i: (0, 0)),
            ],
            out_specs=[
                pl.BlockSpec((row_tile, lane_width), lambda i: (i, 0)),
                pl.BlockSpec((row_tile, lane_width), lambda i: (i, 0)),
            ],
        ),
        compiler_params=pltpu.CompilerParams(
            dimension_semantics=("parallel",),
        ),
    )(scale, phase)

    # Packed row-major order: row r, lane l -> flat = pos*dim + (lane % dim),
    # so flatten, drop any tail padding, and reshape to [max_pos, dim].
    cos = cos2d.reshape(-1)[:total_elems].reshape(max_pos, dim)
    sin = sin2d.reshape(-1)[:total_elems].reshape(max_pos, dim)

    # Two leading singleton axes like the PyTorch buffers.
    return cos[None, None, :, :], sin[None, None, :, :]


class RotaryEmbedding:
    """JAX/Pallas equivalent of the PyTorch RotaryEmbedding module."""

    def __init__(self, dim, max_position_embeddings=2048, base=10000,
                 out_dtype=jnp.float32):
        self.dim = dim
        self.max_position_embeddings = int(max_position_embeddings)
        self.base = float(base)
        self.cos_cached, self.sin_cached = build_rope_cache(
            dim, self.max_position_embeddings, self.base, out_dtype=out_dtype
        )

    def __call__(self, x, seq_len=None):
        seq_len = int(seq_len) if seq_len is not None else x.shape[1]
        # The reference module clamps to the cached length (it does not
        # regenerate a longer cache), so we match that behavior exactly.
        if seq_len > self.max_position_embeddings:
            seq_len = self.max_position_embeddings
        return (
            self.cos_cached[:, :, :seq_len, :],
            self.sin_cached[:, :, :seq_len, :],
        )


if __name__ == "__main__":
    key = jax.random.PRNGKey(0)

    def ref_cache(dim, max_pos, base):
        inv_freq = 1.0 / (base ** (jnp.arange(0, dim, 2, dtype=jnp.float32) / dim))
        t = jnp.arange(max_pos, dtype=jnp.float32)
        freqs = jnp.einsum("i,j->ij", t, inv_freq)
        emb = jnp.concatenate([freqs, freqs], axis=-1)
        return jnp.cos(emb)[None, None, :, :], jnp.sin(emb)[None, None, :, :]

    # --- small shapes consistent with the module (packed path, dim < 128) ---
    batch, seq, dim = 2, 8, 32
    max_pos = 64

    # x only contributes its shape (seq_len = x.shape[1]) to the forward pass.
    x = jax.random.normal(key, (batch, seq, dim), dtype=jnp.float32)

    rope = RotaryEmbedding(dim, max_position_embeddings=max_pos, base=10000)
    cos, sin = rope(x)
    cos = jax.block_until_ready(cos)
    sin = jax.block_until_ready(sin)

    cos_ref, sin_ref = ref_cache(dim, max_pos, 10000.0)
    assert cos.shape == (1, 1, seq, dim) and sin.shape == (1, 1, seq, dim)
    assert jnp.allclose(cos, cos_ref[:, :, :seq, :], atol=1e-5, rtol=1e-5)
    assert jnp.allclose(sin, sin_ref[:, :, :seq, :], atol=1e-5, rtol=1e-5)

    # --- dim >= 128 path (ppr = 1, lane_width = dim) ---
    rope2 = RotaryEmbedding(128, max_position_embeddings=16, base=10000)
    cos2, sin2 = rope2(jnp.zeros((1, 16, 128), dtype=jnp.float32))
    cos2 = jax.block_until_ready(cos2)
    sin2 = jax.block_until_ready(sin2)
    cos2_ref, sin2_ref = ref_cache(128, 16, 10000.0)
    assert jnp.allclose(cos2, cos2_ref, atol=1e-5, rtol=1e-5)
    assert jnp.allclose(sin2, sin2_ref, atol=1e-5, rtol=1e-5)

    # --- non-power-of-two head dim (lcm packing, dim=96 -> lane_width=384) ---
    rope3 = RotaryEmbedding(96, max_position_embeddings=64, base=10000)
    cos3, sin3 = rope3(jnp.zeros((1, 32, 96), dtype=jnp.float32))
    cos3 = jax.block_until_ready(cos3)
    sin3 = jax.block_until_ready(sin3)
    cos3_ref, sin3_ref = ref_cache(96, 64, 10000.0)
    assert jnp.allclose(cos3, cos3_ref[:, :, :32, :], atol=1e-5, rtol=1e-5)
    assert jnp.allclose(sin3, sin3_ref[:, :, :32, :], atol=1e-5, rtol=1e-5)

    # --- multi-step grid path (exercises >=4 grid steps / writeback overlap) ---
    rope4 = RotaryEmbedding(64, max_position_embeddings=512, base=10000)
    cos4, sin4 = rope4(jnp.zeros((1, 512, 64), dtype=jnp.float32))
    cos4 = jax.block_until_ready(cos4)
    sin4 = jax.block_until_ready(sin4)
    cos4_ref, sin4_ref = ref_cache(64, 512, 10000.0)
    assert jnp.allclose(cos4, cos4_ref, atol=1e-5, rtol=1e-5)
    assert jnp.allclose(sin4, sin4_ref, atol=1e-5, rtol=1e-5)

    print("KERNEL_OK")
</pallas_src>

<mosaic_0001>
module attributes {stable_mosaic.version = 11 : i64} {
  func.func @_rope_cache_kernel(%arg0: i32, %arg1: memref<1x128xf32, #tpu.memory_space<vmem>>, %arg2: memref<1x128xf32, #tpu.memory_space<vmem>>, %arg3: memref<16x128xf32, #tpu.memory_space<vmem>>, %arg4: memref<16x128xf32, #tpu.memory_space<vmem>>) attributes {dimension_semantics = [#tpu.dimension_semantics<parallel>], iteration_bounds = array<i64: 1>, scalar_prefetch = 0 : i64, scratch_operands = 0 : i64, tpu.core_type = #tpu.core_type<tc>, window_params = [{pipeline_mode = #tpu.pipeline_mode<synchronous>, transform_indices = @transform_0, window_bounds = array<i64: 1, 128>}, {pipeline_mode = #tpu.pipeline_mode<synchronous>, transform_indices = @transform_1, window_bounds = array<i64: 1, 128>}, {transform_indices = @transform_2, window_bounds = array<i64: 16, 128>}, {transform_indices = @transform_3, window_bounds = array<i64: 16, 128>}]} {
    %0 = tpu.iota {dimensions = array<i32: 0>} : vector<16x1xi32>
    %c16_i32 = arith.constant 16 : i32
    %1 = arith.muli %arg0, %c16_i32 : i32
    %2 = vector.broadcast %1 : i32 to vector<16x1xi32>
    %3 = arith.addi %0, %2 : vector<16x1xi32>
    %4 = arith.sitofp %3 : vector<16x1xi32> to vector<16x1xf32>
    %c0 = arith.constant 0 : index
    %c0_0 = arith.constant 0 : index
    %5 = vector.load %arg1[%c0, %c0_0] : memref<1x128xf32, #tpu.memory_space<vmem>>, vector<1x128xf32>
    %6 = vector.broadcast %4 : vector<16x1xf32> to vector<16x128xf32>
    %7 = vector.broadcast %5 : vector<1x128xf32> to vector<16x128xf32>
    %8 = arith.mulf %6, %7 : vector<16x128xf32>
    %c0_1 = arith.constant 0 : index
    %c0_2 = arith.constant 0 : index
    %9 = vector.load %arg2[%c0_1, %c0_2] : memref<1x128xf32, #tpu.memory_space<vmem>>, vector<1x128xf32>
    %10 = vector.broadcast %9 : vector<1x128xf32> to vector<16x128xf32>
    %11 = arith.addf %8, %10 : vector<16x128xf32>
    %12 = math.cos %11 : vector<16x128xf32>
    %c0_3 = arith.constant 0 : index
    %c0_4 = arith.constant 0 : index
    %13 = vector.load %arg3[%c0_3, %c0_4] : memref<16x128xf32, #tpu.memory_space<vmem>>, vector<16x128xf32>
    tpu.vector_store %arg3[%c0_3, %c0_4], %12 {strides = array<i32>} : memref<16x128xf32, #tpu.memory_space<vmem>>, vector<16x128xf32>,
    %14 = math.sin %11 : vector<16x128xf32>
    %c0_5 = arith.constant 0 : index
    %c0_6 = arith.constant 0 : index
    %15 = vector.load %arg4[%c0_5, %c0_6] : memref<16x128xf32, #tpu.memory_space<vmem>>, vector<16x128xf32>
    tpu.vector_store %arg4[%c0_5, %c0_6], %14 {strides = array<i32>} : memref<16x128xf32, #tpu.memory_space<vmem>>, vector<16x128xf32>,
    return
  }
  func.func @transform_0(%arg0: i32) -> (i32, i32) {
    %c0_i32 = arith.constant 0 : i32
    %c0_i32_0 = arith.constant 0 : i32
    %c0_i32_1 = arith.constant 0 : i32
    return %c0_i32, %c0_i32_0 : i32, i32
  }
  func.func @transform_1(%arg0: i32) -> (i32, i32) {
    %c0_i32 = arith.constant 0 : i32
    %c0_i32_0 = arith.constant 0 : i32
    %c0_i32_1 = arith.constant 0 : i32
    return %c0_i32, %c0_i32_0 : i32, i32
  }
  func.func @transform_2(%arg0: i32) -> (i32, i32) {
    %c0_i32 = arith.constant 0 : i32
    %c0_i32_0 = arith.constant 0 : i32
    return %arg0, %c0_i32 : i32, i32
  }
  func.func @transform_3(%arg0: i32) -> (i32, i32) {
    %c0_i32 = arith.constant 0 : i32
    %c0_i32_0 = arith.constant 0 : i32
    return %arg0, %c0_i32 : i32, i32
  }
}

</mosaic_0001>

<llo_original>
// kernel: tpu_custom_call.1
$region0: #{tpu_custom_call.1}
  #allocation0 [shape = 'u32[]', space=smem, size = 0x4, offset = 0x4, fixed_abs, tag = 'smem constant byte address 0x4 - core index']
  #allocation1 [shape = 'u32[72,128]{1,0:T(1,128)}', space=vmem, size = 0x9000, scoped, tag = 'internal scratch']
  %s0 = inlined_call_operand.hbm [shape: f32[1,128], index: 0, kind: input, shape index: {}]
  %s1 = inlined_call_operand.hbm [shape: f32[1,128], index: 1, kind: input, shape index: {}]
  %s2 = inlined_call_operand.hbm [shape: f32[16,128], index: 2, kind: output, shape index: {0}]
  %s3 = inlined_call_operand.hbm [shape: f32[16,128], index: 3, kind: output, shape index: {1}]
  %4 = xla_tuple %s2, %s3
  %s5 = sld [smem:[#allocation0]]
  $region34: #{tpu_custom_call.1} parent=0
    _
  %s7 = ssub.s32 1, %s5
  %s8 = scalar_select 0, %s7, %s5
  $region1: #{tpu_custom_call.1} parent=0
    #allocation2 [shape = 'u8[512]{0}', space=vmem, size = 0x400, scoped, tag = 'input window, operand 0, single buffered']
    #allocation3 [shape = 's32[1]{0}', space=sflag, size = 0x4, scoped, tag = 'scoped memory for tpu_custom_call.1']
    #allocation4 [shape = 's32[1]{0}', space=sflag, size = 0x4, scoped, tag = 'scoped memory for tpu_custom_call.1']
    #allocation5 [shape = 'u8[512]{0}', space=vmem, size = 0x400, scoped, tag = 'input window, operand 1, single buffered']
    #allocation6 [shape = 's32[1]{0}', space=sflag, size = 0x4, scoped, tag = 'scoped memory for tpu_custom_call.1']
    #allocation7 [shape = 'u8[8192]{0}', space=vmem, size = 0x2000, scoped, tag = 'output window, operand 0, single buffered']
    #allocation8 [shape = 'u8[8192]{0}', space=vmem, size = 0x2000, scoped, tag = 'output window, operand 1, single buffered']
    #allocation9 [shape = 's32[1]{0}', space=sflag, size = 0x4, scoped, tag = 'scoped memory for tpu_custom_call.1']
    %9 = vsyncpa [#allocation3], 0
    %10 = vsyncpa [#allocation6], 0
    %11 = vsyncpa [#allocation4], 0
    %12 = vsyncpa [#allocation9], 0
    // Predicated region
    $region2: #{tpu_custom_call.1} parent=1 // pred_check
      _
    $region3: #{tpu_custom_call.1} parent=1 // pred_check_branch
      %14 = sbr.rel (0) target = $region5
    $region4: #{tpu_custom_call.1} parent=1 // pred_region
      %16 = vsyncadd [#allocation3], 0
      %s18 = sshll.u32 %s0, 4
      %s19 = int_to_ptr.hbm [resolvable:$true] %s18
      %s20 = sshll.u32 [#allocation2], 4
      %s21 = int_to_ptr.vmem [resolvable:$true] %s20
      %23 = dma.hbm_to_vmem [thread:$0]  %s19, 16, %s21, [#allocation3]
    $region5: #{tpu_custom_call.1} parent=1 // pred_fallthru
      _
    // Predicated region
    $region6: #{tpu_custom_call.1} parent=1 // pred_check
      _
    $region7: #{tpu_custom_call.1} parent=1 // pred_check_branch
      %25 = sbr.rel (0) target = $region9
    $region8: #{tpu_custom_call.1} parent=1 // pred_region
      %27 = vsyncadd [#allocation6], 0
      %s29 = sshll.u32 %s1, 4
      %s30 = int_to_ptr.hbm [resolvable:$true] %s29
      %s31 = sshll.u32 [#allocation5], 4
      %s32 = int_to_ptr.vmem [resolvable:$true] %s31
      %34 = dma.hbm_to_vmem [thread:$0]  %s30, 16, %s32, [#allocation6]
    $region9: #{tpu_custom_call.1} parent=1 // pred_fallthru
      _
    // Predicated region
    $region10: #{tpu_custom_call.1} parent=1 // pred_check
      _
    $region11: #{tpu_custom_call.1} parent=1 // pred_check_branch
      %36 = sbr.rel (0) target = $region13
    $region12: #{tpu_custom_call.1} parent=1 // pred_region
      %38 = dma.done [#allocation3], 16
    $region13: #{tpu_custom_call.1} parent=1 // pred_fallthru
      _
    // Predicated region
    $region14: #{tpu_custom_call.1} parent=1 // pred_check
      _
    $region15: #{tpu_custom_call.1} parent=1 // pred_check_branch
      %40 = sbr.rel (0) target = $region17
    $region16: #{tpu_custom_call.1} parent=1 // pred_region
      %42 = dma.done [#allocation6], 16
    $region17: #{tpu_custom_call.1} parent=1 // pred_fallthru
      _
    %v43 = vlaneseq
    %v44 = vshrl.u32 %v43, 7
    %v45 = vadd.s32 %v44, 8
    %s46 = smul.u32 0, 16
    %v47 = vstv %s46
    %v48 = vadd.s32 %v44, %v47
    %v49 = vadd.s32 %v45, %v47
    %v50 = vcvt.s32.f32 %v48
    %v51 = vcvt.s32.f32 %v49
    %v52 = vld [vmem:[#allocation2] sm:$0x1]
    %v54 = vperm.slane %v52, 0
    %v56 = vmul.f32 %v50, %v54
    %v57 = vmul.f32 %v51, %v54
    %v58 = vld [vmem:[#allocation5] sm:$0x1]
    %v60 = vperm.slane %v58, 0
    %v62 = vadd.f32 %v56, %v60
    %v63 = vadd.f32 %v57, %v60
    %v64 = vand.u32 2147483647, %v62
    %vm65 = vcmp.le.f32.partialorder %v64, 0.7853982
    %vm66 = vcmp.lt.s32.totalorder %v62, 0
    %v67 = vand.u32 %v62, 2139095040
    %v68 = vshrl.u32 %v67, 23
    %v69 = vsub.s32 %v68, 127
    %v70 = vand.u32 2147483647, %v62
    %v71 = vand.u32 %v70, 8388607
    %v72 = vor.u32 %v71, 8388608
    %v73 = vsub.s32 0, %v72
    %v74 = vadd.s32 %v69, 1
    %vm75 = vcmp.gt.s32.totalorder %v74, 0
    %v76 = vsel %vm75, %v74, 0
    %v77 = vshrl.u32 %v76, 5
    %v78 = vand.u32 %v76, 31
    %v79 = vsub.s32 32, %v78
    %v80 = vshrl.u32 683565275, %v79
    %v81 = vshll.u32 683565275, %v78
    %v82 = vshrl.u32 2475754826, %v79
    %v83 = vor.u32 %v81, %v82
    %v84 = vshll.u32 2475754826, %v78
    %v85 = vshrl.u32 2131351028, %v79
    %v86 = vor.u32 %v84, %v85
    %v87 = vshll.u32 2131351028, %v78
    %v88 = vshrl.u32 2102212464, %v79
    %v89 = vor.u32 %v87, %v88
    %v90 = vshll.u32 2102212464, %v78
    %v91 = vshrl.u32 920167782, %v79
    %v92 = vor.u32 %v90, %v91
    %v93 = vshll.u32 920167782, %v78
    %v94 = vshrl.u32 1326507024, %v79
    %v95 = vor.u32 %v93, %v94
    %vm96 = vcmp.lt.s32.totalorder %v77, 1
    %vm97 = vcmp.lt.s32.totalorder %v77, 2
    %vm98 = vcmp.lt.s32.totalorder %v77, 3
    %vm99 = vcmp.lt.s32.totalorder %v77, 4
    %v100 = vsel %vm96, %v80, %v83
    %v101 = vsel %vm99, %v89, 2102212464
    %v102 = vsel %vm98, %v86, %v101
    %v103 = vsel %vm97, %v100, %v102
    %v104 = vsel %vm96, %v83, %v86
    %v105 = vsel %vm99, %v92, 920167782
    %v106 = vsel %vm98, %v89, %v105
    %v107 = vsel %vm97, %v104, %v106
    %v108 = vsel %vm96, %v86, %v89
    %v109 = vsel %vm99, %v95, 1326507024
    %v110 = vsel %vm98, %v92, %v109
    %v111 = vsel %vm97, %v108, %v110
    %v112 = vshll.u32 %v72, 8
    %v113 = vand.u32 %v112, 65535
    %v114 = vshrl.u32 %v112, 16
    %v115 = vand.u32 %v111, 65535
    %v116 = vshrl.u32 %v111, 16
    %v117 = vmul.u32 %v113, %v115
    %v118 = vmul.u32 %v113, %v116
    %v119 = vmul.u32 %v114, %v115
    %v120 = vmul.u32 %v114, %v116
    %v121 = vshll.u32 %v118, 16
    %v122 = vshrl.u32 %v118, 16
    %v123 = vshll.u32 %v119, 16
    %v124 = vshrl.u32 %v119, 16
    %vm125 = vc.u32 %v117, %v121
    %v126 = vsel %vm125, 1, 0
    %v127 = vadd.s32 %v117, %v121
    %v128 = vadd.s32 %v120, %v126
    %vm129 = vc.u32 %v127, %v123
    %v130 = vsel %vm129, 1, 0
    %v131 = vadd.s32 %v127, %v123
    %v132 = vadd.s32 %v128, %v130
    %v133 = vadd.s32 %v132, %v122
    %v134 = vadd.s32 %v133, %v124
    %v135 = vand.u32 %v112, 65535
    %v136 = vshrl.u32 %v112, 16
    %v137 = vand.u32 %v107, 65535
    %v138 = vshrl.u32 %v107, 16
    %v139 = vmul.u32 %v135, %v137
    %v140 = vmul.u32 %v135, %v138
    %v141 = vmul.u32 %v136, %v137
    %v142 = vmul.u32 %v136, %v138
    %v143 = vshll.u32 %v140, 16
    %v144 = vshrl.u32 %v140, 16
    %v145 = vshll.u32 %v141, 16
    %v146 = vshrl.u32 %v141, 16
    %vm147 = vc.u32 %v139, %v143
    %v148 = vsel %vm147, 1, 0
    %v149 = vadd.s32 %v139, %v143
    %v150 = vadd.s32 %v142, %v148
    %vm151 = vc.u32 %v149, %v145
    %v152 = vsel %vm151, 1, 0
    %v153 = vadd.s32 %v149, %v145
    %v154 = vadd.s32 %v150, %v152
    %v155 = vadd.s32 %v154, %v144
    %v156 = vadd.s32 %v155, %v146
    %v157 = vmul.u32 %v112, %v103
    %v158 = vadd.s32 %v134, %v153
    %vm159 = vc.u32 %v134, %v153
    %v160 = vadd.s32 %v156, 1
    %v161 = vsel %vm159, %v160, %v156
    %v162 = vadd.s32 %v157, %v161
    %v163 = vadd.s32 %v162, 536870912
    %v164 = vshrl.u32 %v163, 30
    %v165 = vshll.u32 %v164, 30
    %v166 = vsub.s32 %v162, %v165
    %vm167 = vcmp.lt.s32.totalorder %v166, 0
    %v168 = vsub.s32 0, %v166
    %v169 = vsel %vm167, %v168, %v166
    %v170 = vclz %v169
    %v171 = vsub.s32 %v170, 2
    %vm172 = vcmp.gt.s32.totalorder 0, %v171
    %v173 = vsel %vm172, 0, %v171
    %v174 = vsub.s32 32, %v173
    %v175 = vshll.u32 %v166, %v173
    %v176 = vshrl.u32 %v158, %v174
    %v177 = vor.u32 %v175, %v176
    %v178 = vsub.s32 4294967266, %v173
    %v179 = vadd.s32 %v178, 127
    %v180 = vshll.u32 %v179, 23
    %v181 = vor.u32 4788187, %v180
    %v182 = vand.u32 2147483647, %v181
    %v184 = vcvt.s32.f32 %v177
    %v185 = vmul.f32 %v184, %v182
    %v186 = vxor.u32 %v185, 2147483648
    %v187 = vsel %vm66, %v186, %v185
    %v188 = vsub.s32 4, %v164
    %v189 = vsel %vm66, %v188, %v164
    %v190 = vsel %vm65, %v62, %v187
    %v191 = vsel %vm65, 0, %v189
    %v192 = vmul.f32 %v190, %v190
    %v193 = vmul.f32 %v192, -0.001358992
    %v194 = vadd.f32 %v193, 0.041655596
    %v195 = vmul.f32 %v192, %v194
    %v196 = vadd.f32 %v195, -0.4999988
    %v197 = vmul.f32 %v192, %v196
    %v198 = vadd.f32 1.0, %v197
    %v199 = vmul.f32 %v190, %v190
    %v200 = vmul.f32 %v199, -0.00019511016
    %v201 = vadd.f32 %v200, 0.008332121
    %v202 = vmul.f32 %v199, %v201
    %v203 = vadd.f32 %v202, -0.16666654
    %v204 = vmul.f32 %v199, %v203
    %v205 = vadd.f32 %v204, 1.0
    %v206 = vmul.f32 %v205, %v190
    %vm207 = vweird.f32 %v62
    %v208 = vand.u32 %v191, 3
    %vm209 = vcmp.lt.s32.totalorder %v208, 2
    %vm210 = vcmp.eq.s32.totalorder %v208, 0
    %v211 = vxor.u32 %v206, 2147483648
    %v212 = vsel %vm210, %v198, %v211
    %vm213 = vcmp.eq.s32.totalorder %v208, 2
    %v214 = vxor.u32 %v198, 2147483648
    %v215 = vsel %vm213, %v214, %v206
    %v216 = vsel %vm209, %v212, %v215
    %v217 = vsel %vm207, nan, %v216
    %v218 = vand.u32 2147483647, %v63
    %vm219 = vcmp.le.f32.partialorder %v218, 0.7853982
    %vm220 = vcmp.lt.s32.totalorder %v63, 0
    %v221 = vand.u32 %v63, 2139095040
    %v222 = vshrl.u32 %v221, 23
    %v223 = vsub.s32 %v222, 127
    %v224 = vand.u32 2147483647, %v63
    %v225 = vand.u32 %v224, 8388607
    %v226 = vor.u32 %v225, 8388608
    %v227 = vsub.s32 0, %v226
    %v228 = vadd.s32 %v223, 1
    %vm229 = vcmp.gt.s32.totalorder %v228, 0
    %v230 = vsel %vm229, %v228, 0
    %v231 = vshrl.u32 %v230, 5
    %v232 = vand.u32 %v230, 31
    %v233 = vsub.s32 32, %v232
    %v234 = vshrl.u32 683565275, %v233
    %v235 = vshll.u32 683565275, %v232
    %v236 = vshrl.u32 2475754826, %v233
    %v237 = vor.u32 %v235, %v236
    %v238 = vshll.u32 2475754826, %v232
    %v239 = vshrl.u32 2131351028, %v233
    %v240 = vor.u32 %v238, %v239
    %v241 = vshll.u32 2131351028, %v232
    %v242 = vshrl.u32 2102212464, %v233
    %v243 = vor.u32 %v241, %v242
    %v244 = vshll.u32 2102212464, %v232
    %v245 = vshrl.u32 920167782, %v233
    %v246 = vor.u32 %v244, %v245
    %v247 = vshll.u32 920167782, %v232
    %v248 = vshrl.u32 1326507024, %v233
    %v249 = vor.u32 %v247, %v248
    %vm250 = vcmp.lt.s32.totalorder %v231, 1
    %vm251 = vcmp.lt.s32.totalorder %v231, 2
    %vm252 = vcmp.lt.s32.totalorder %v231, 3
    %vm253 = vcmp.lt.s32.totalorder %v231, 4
    %v254 = vsel %vm250, %v234, %v237
    %v255 = vsel %vm253, %v243, 2102212464
    %v256 = vsel %vm252, %v240, %v255
    %v257 = vsel %vm251, %v254, %v256
    %v258 = vsel %vm250, %v237, %v240
    %v259 = vsel %vm253, %v246, 920167782
    %v260 = vsel %vm252, %v243, %v259
    %v261 = vsel %vm251, %v258, %v260
    %v262 = vsel %vm250, %v240, %v243
    %v263 = vsel %vm253, %v249, 1326507024
    %v264 = vsel %vm252, %v246, %v263
    %v265 = vsel %vm251, %v262, %v264
    %v266 = vshll.u32 %v226, 8
    %v267 = vand.u32 %v266, 65535
    %v268 = vshrl.u32 %v266, 16
    %v269 = vand.u32 %v265, 65535
    %v270 = vshrl.u32 %v265, 16
    %v271 = vmul.u32 %v267, %v269
    %v272 = vmul.u32 %v267, %v270
    %v273 = vmul.u32 %v268, %v269
    %v274 = vmul.u32 %v268, %v270
    %v275 = vshll.u32 %v272, 16
    %v276 = vshrl.u32 %v272, 16
    %v277 = vshll.u32 %v273, 16
    %v278 = vshrl.u32 %v273, 16
    %vm279 = vc.u32 %v271, %v275
    %v280 = vsel %vm279, 1, 0
    %v281 = vadd.s32 %v271, %v275
    %v282 = vadd.s32 %v274, %v280
    %vm283 = vc.u32 %v281, %v277
    %v284 = vsel %vm283, 1, 0
    %v285 = vadd.s32 %v281, %v277
    %v286 = vadd.s32 %v282, %v284
    %v287 = vadd.s32 %v286, %v276
    %v288 = vadd.s32 %v287, %v278
    %v289 = vand.u32 %v266, 65535
    %v290 = vshrl.u32 %v266, 16
    %v291 = vand.u32 %v261, 65535
    %v292 = vshrl.u32 %v261, 16
    %v293 = vmul.u32 %v289, %v291
    %v294 = vmul.u32 %v289, %v292
    %v295 = vmul.u32 %v290, %v291
    %v296 = vmul.u32 %v290, %v292
    %v297 = vshll.u32 %v294, 16
    %v298 = vshrl.u32 %v294, 16
    %v299 = vshll.u32 %v295, 16
    %v300 = vshrl.u32 %v295, 16
    %vm301 = vc.u32 %v293, %v297
    %v302 = vsel %vm301, 1, 0
    %v303 = vadd.s32 %v293, %v297
    %v304 = vadd.s32 %v296, %v302
    %vm305 = vc.u32 %v303, %v299
    %v306 = vsel %vm305, 1, 0
    %v307 = vadd.s32 %v303, %v299
    %v308 = vadd.s32 %v304, %v306
    %v309 = vadd.s32 %v308, %v298
    %v310 = vadd.s32 %v309, %v300
    %v311 = vmul.u32 %v266, %v257
    %v312 = vadd.s32 %v288, %v307
    %vm313 = vc.u32 %v288, %v307
    %v314 = vadd.s32 %v310, 1
    %v315 = vsel %vm313, %v314, %v310
    %v316 = vadd.s32 %v311, %v315
    %v317 = vadd.s32 %v316, 536870912
    %v318 = vshrl.u32 %v317, 30
    %v319 = vshll.u32 %v318, 30
    %v320 = vsub.s32 %v316, %v319
    %vm321 = vcmp.lt.s32.totalorder %v320, 0
    %v322 = vsub.s32 0, %v320
    %v323 = vsel %vm321, %v322, %v320
    %v324 = vclz %v323
    %v325 = vsub.s32 %v324, 2
    %vm326 = vcmp.gt.s32.totalorder 0, %v325
    %v327 = vsel %vm326, 0, %v325
    %v328 = vsub.s32 32, %v327
    %v329 = vshll.u32 %v320, %v327
    %v330 = vshrl.u32 %v312, %v328
    %v331 = vor.u32 %v329, %v330
    %v332 = vsub.s32 4294967266, %v327
    %v333 = vadd.s32 %v332, 127
    %v334 = vshll.u32 %v333, 23
    %v335 = vor.u32 4788187, %v334
    %v336 = vand.u32 2147483647, %v335
    %v338 = vcvt.s32.f32 %v331
    %v339 = vmul.f32 %v338, %v336
    %v340 = vxor.u32 %v339, 2147483648
    %v341 = vsel %vm220, %v340, %v339
    %v342 = vsub.s32 4, %v318
    %v343 = vsel %vm220, %v342, %v318
    %v344 = vsel %vm219, %v63, %v341
    %v345 = vsel %vm219, 0, %v343
    %v346 = vmul.f32 %v344, %v344
    %v347 = vmul.f32 %v346, -0.001358992
    %v348 = vadd.f32 %v347, 0.041655596
    %v349 = vmul.f32 %v346, %v348
    %v350 = vadd.f32 %v349, -0.4999988
    %v351 = vmul.f32 %v346, %v350
    %v352 = vadd.f32 1.0, %v351
    %v353 = vmul.f32 %v344, %v344
    %v354 = vmul.f32 %v353, -0.00019511016
    %v355 = vadd.f32 %v354, 0.008332121
    %v356 = vmul.f32 %v353, %v355
    %v357 = vadd.f32 %v356, -0.16666654
    %v358 = vmul.f32 %v353, %v357
    %v359 = vadd.f32 %v358, 1.0
    %v360 = vmul.f32 %v359, %v344
    %vm361 = vweird.f32 %v63
    %v362 = vand.u32 %v345, 3
    %vm363 = vcmp.lt.s32.totalorder %v362, 2
    %vm364 = vcmp.eq.s32.totalorder %v362, 0
    %v365 = vxor.u32 %v360, 2147483648
    %v366 = vsel %vm364, %v352, %v365
    %vm367 = vcmp.eq.s32.totalorder %v362, 2
    %v368 = vxor.u32 %v352, 2147483648
    %v369 = vsel %vm367, %v368, %v360
    %v370 = vsel %vm363, %v366, %v369
    %v371 = vsel %vm361, nan, %v370
    %372 = vst [vmem:[#allocation7] sm:$0xff] %v217
    %373 = vst [vmem:[#allocation7 + $0x8] sm:$0xff] %v371
    %v374 = vand.u32 2147483647, %v62
    %vm375 = vcmp.le.f32.partialorder %v374, 0.7853982
    %vm376 = vcmp.lt.s32.totalorder %v62, 0
    %v377 = vand.u32 %v62, 2139095040
    %v378 = vshrl.u32 %v377, 23
    %v379 = vsub.s32 %v378, 127
    %v380 = vand.u32 2147483647, %v62
    %v381 = vand.u32 %v380, 8388607
    %v382 = vor.u32 %v381, 8388608
    %v383 = vsub.s32 0, %v382
    %v384 = vadd.s32 %v379, 1
    %vm385 = vcmp.gt.s32.totalorder %v384, 0
    %v386 = vsel %vm385, %v384, 0
    %v387 = vshrl.u32 %v386, 5
    %v388 = vand.u32 %v386, 31
    %v389 = vsub.s32 32, %v388
    %v390 = vshrl.u32 683565275, %v389
    %v391 = vshll.u32 683565275, %v388
    %v392 = vshrl.u32 2475754826, %v389
    %v393 = vor.u32 %v391, %v392
    %v394 = vshll.u32 2475754826, %v388
    %v395 = vshrl.u32 2131351028, %v389
    %v396 = vor.u32 %v394, %v395
    %v397 = vshll.u32 2131351028, %v388
    %v398 = vshrl.u32 2102212464, %v389
    %v399 = vor.u32 %v397, %v398
    %v400 = vshll.u32 2102212464, %v388
    %v401 = vshrl.u32 920167782, %v389
    %v402 = vor.u32 %v400, %v401
    %v403 = vshll.u32 920167782, %v388
    %v404 = vshrl.u32 1326507024, %v389
    %v405 = vor.u32 %v403, %v404
    %vm406 = vcmp.lt.s32.totalorder %v387, 1
    %vm407 = vcmp.lt.s32.totalorder %v387, 2
    %vm408 = vcmp.lt.s32.totalorder %v387, 3
    %vm409 = vcmp.lt.s32.totalorder %v387, 4
    %v410 = vsel %vm406, %v390, %v393
    %v411 = vsel %vm409, %v399, 2102212464
    %v412 = vsel %vm408, %v396, %v411
    %v413 = vsel %vm407, %v410, %v412
    %v414 = vsel %vm406, %v393, %v396
    %v415 = vsel %vm409, %v402, 920167782
    %v416 = vsel %vm408, %v399, %v415
    %v417 = vsel %vm407, %v414, %v416
    %v418 = vsel %vm406, %v396, %v399
    %v419 = vsel %vm409, %v405, 1326507024
    %v420 = vsel %vm408, %v402, %v419
    %v421 = vsel %vm407, %v418, %v420
    %v422 = vshll.u32 %v382, 8
    %v423 = vand.u32 %v422, 65535
    %v424 = vshrl.u32 %v422, 16
    %v425 = vand.u32 %v421, 65535
    %v426 = vshrl.u32 %v421, 16
    %v427 = vmul.u32 %v423, %v425
    %v428 = vmul.u32 %v423, %v426
    %v429 = vmul.u32 %v424, %v425
    %v430 = vmul.u32 %v424, %v426
    %v431 = vshll.u32 %v428, 16
    %v432 = vshrl.u32 %v428, 16
    %v433 = vshll.u32 %v429, 16
    %v434 = vshrl.u32 %v429, 16
    %vm435 = vc.u32 %v427, %v431
    %v436 = vsel %vm435, 1, 0
    %v437 = vadd.s32 %v427, %v431
    %v438 = vadd.s32 %v430, %v436
    %vm439 = vc.u32 %v437, %v433
    %v440 = vsel %vm439, 1, 0
    %v441 = vadd.s32 %v437, %v433
    %v442 = vadd.s32 %v438, %v440
    %v443 = vadd.s32 %v442, %v432
    %v444 = vadd.s32 %v443, %v434
    %v445 = vand.u32 %v422, 65535
    %v446 = vshrl.u32 %v422, 16
    %v447 = vand.u32 %v417, 65535
    %v448 = vshrl.u32 %v417, 16
    %v449 = vmul.u32 %v445, %v447
    %v450 = vmul.u32 %v445, %v448
    %v451 = vmul.u32 %v446, %v447
    %v452 = vmul.u32 %v446, %v448
    %v453 = vshll.u32 %v450, 16
    %v454 = vshrl.u32 %v450, 16
    %v455 = vshll.u32 %v451, 16
    %v456 = vshrl.u32 %v451, 16
    %vm457 = vc.u32 %v449, %v453
    %v458 = vsel %vm457, 1, 0
    %v459 = vadd.s32 %v449, %v453
    %v460 = vadd.s32 %v452, %v458
    %vm461 = vc.u32 %v459, %v455
    %v462 = vsel %vm461, 1, 0
    %v463 = vadd.s32 %v459, %v455
    %v464 = vadd.s32 %v460, %v462
    %v465 = vadd.s32 %v464, %v454
    %v466 = vadd.s32 %v465, %v456
    %v467 = vmul.u32 %v422, %v413
    %v468 = vadd.s32 %v444, %v463
    %vm469 = vc.u32 %v444, %v463
    %v470 = vadd.s32 %v466, 1
    %v471 = vsel %vm469, %v470, %v466
    %v472 = vadd.s32 %v467, %v471
    %v473 = vadd.s32 %v472, 536870912
    %v474 = vshrl.u32 %v473, 30
    %v475 = vshll.u32 %v474, 30
    %v476 = vsub.s32 %v472, %v475
    %vm477 = vcmp.lt.s32.totalorder %v476, 0
    %v478 = vsub.s32 0, %v476
    %v479 = vsel %vm477, %v478, %v476
    %v480 = vclz %v479
    %v481 = vsub.s32 %v480, 2
    %vm482 = vcmp.gt.s32.totalorder 0, %v481
    %v483 = vsel %vm482, 0, %v481
    %v484 = vsub.s32 32, %v483
    %v485 = vshll.u32 %v476, %v483
    %v486 = vshrl.u32 %v468, %v484
    %v487 = vor.u32 %v485, %v486
    %v488 = vsub.s32 4294967266, %v483
    %v489 = vadd.s32 %v488, 127
    %v490 = vshll.u32 %v489, 23
    %v491 = vor.u32 4788187, %v490
    %v492 = vand.u32 2147483647, %v491
    %v494 = vcvt.s32.f32 %v487
    %v495 = vmul.f32 %v494, %v492
    %v496 = vxor.u32 %v495, 2147483648
    %v497 = vsel %vm376, %v496, %v495
    %v498 = vsub.s32 4, %v474
    %v499 = vsel %vm376, %v498, %v474
    %v500 = vsel %vm375, %v62, %v497
    %v501 = vsel %vm375, 0, %v499
    %v502 = vmul.f32 %v500, %v500
    %v503 = vmul.f32 %v502, -0.001358992
    %v504 = vadd.f32 %v503, 0.041655596
    %v505 = vmul.f32 %v502, %v504
    %v506 = vadd.f32 %v505, -0.4999988
    %v507 = vmul.f32 %v502, %v506
    %v508 = vadd.f32 1.0, %v507
    %v509 = vmul.f32 %v500, %v500
    %v510 = vmul.f32 %v509, -0.00019511016
    %v511 = vadd.f32 %v510, 0.008332121
    %v512 = vmul.f32 %v509, %v511
    %v513 = vadd.f32 %v512, -0.16666654
    %v514 = vmul.f32 %v509, %v513
    %v515 = vadd.f32 %v514, 1.0
    %v516 = vmul.f32 %v515, %v500
    %vm517 = vweird.f32 %v62
    %v518 = vadd.s32 %v501, 3
    %v519 = vand.u32 %v518, 3
    %vm520 = vcmp.lt.s32.totalorder %v519, 2
    %vm521 = vcmp.eq.s32.totalorder %v519, 0
    %v522 = vxor.u32 %v516, 2147483648
    %v523 = vsel %vm521, %v508, %v522
    %vm524 = vcmp.eq.s32.totalorder %v519, 2
    %v525 = vxor.u32 %v508, 2147483648
    %v526 = vsel %vm524, %v525, %v516
    %v527 = vsel %vm520, %v523, %v526
    %v528 = vsel %vm517, nan, %v527
    %v529 = vand.u32 2147483647, %v63
    %vm530 = vcmp.le.f32.partialorder %v529, 0.7853982
    %vm531 = vcmp.lt.s32.totalorder %v63, 0
    %v532 = vand.u32 %v63, 2139095040
    %v533 = vshrl.u32 %v532, 23
    %v534 = vsub.s32 %v533, 127
    %v535 = vand.u32 2147483647, %v63
    %v536 = vand.u32 %v535, 8388607
    %v537 = vor.u32 %v536, 8388608
    %v538 = vsub.s32 0, %v537
    %v539 = vadd.s32 %v534, 1
    %vm540 = vcmp.gt.s32.totalorder %v539, 0
    %v541 = vsel %vm540, %v539, 0
    %v542 = vshrl.u32 %v541, 5
    %v543 = vand.u32 %v541, 31
    %v544 = vsub.s32 32, %v543
    %v545 = vshrl.u32 683565275, %v544
    %v546 = vshll.u32 683565275, %v543
    %v547 = vshrl.u32 2475754826, %v544
    %v548 = vor.u32 %v546, %v547
    %v549 = vshll.u32 2475754826, %v543
    %v550 = vshrl.u32 2131351028, %v544
    %v551 = vor.u32 %v549, %v550
    %v552 = vshll.u32 2131351028, %v543
    %v553 = vshrl.u32 2102212464, %v544
    %v554 = vor.u32 %v552, %v553
    %v555 = vshll.u32 2102212464, %v543
    %v556 = vshrl.u32 920167782, %v544
    %v557 = vor.u32 %v555, %v556
    %v558 = vshll.u32 920167782, %v543
    %v559 = vshrl.u32 1326507024, %v544
    %v560 = vor.u32 %v558, %v559
    %vm561 = vcmp.lt.s32.totalorder %v542, 1
    %vm562 = vcmp.lt.s32.totalorder %v542, 2
    %vm563 = vcmp.lt.s32.totalorder %v542, 3
    %vm564 = vcmp.lt.s32.totalorder %v542, 4
    %v565 = vsel %vm561, %v545, %v548
    %v566 = vsel %vm564, %v554, 2102212464
    %v567 = vsel %vm563, %v551, %v566
    %v568 = vsel %vm562, %v565, %v567
    %v569 = vsel %vm561, %v548, %v551
    %v570 = vsel %vm564, %v557, 920167782
    %v571 = vsel %vm563, %v554, %v570
    %v572 = vsel %vm562, %v569, %v571
    %v573 = vsel %vm561, %v551, %v554
    %v574 = vsel %vm564, %v560, 1326507024
    %v575 = vsel %vm563, %v557, %v574
    %v576 = vsel %vm562, %v573, %v575
    %v577 = vshll.u32 %v537, 8
    %v578 = vand.u32 %v577, 65535
    %v579 = vshrl.u32 %v577, 16
    %v580 = vand.u32 %v576, 65535
    %v581 = vshrl.u32 %v576, 16
    %v582 = vmul.u32 %v578, %v580
    %v583 = vmul.u32 %v578, %v581
    %v584 = vmul.u32 %v579, %v580
    %v585 = vmul.u32 %v579, %v581
    %v586 = vshll.u32 %v583, 16
    %v587 = vshrl.u32 %v583, 16
    %v588 = vshll.u32 %v584, 16
    %v589 = vshrl.u32 %v584, 16
    %vm590 = vc.u32 %v582, %v586
    %v591 = vsel %vm590, 1, 0
    %v592 = vadd.s32 %v582, %v586
    %v593 = vadd.s32 %v585, %v591
    %vm594 = vc.u32 %v592, %v588
    %v595 = vsel %vm594, 1, 0
    %v596 = vadd.s32 %v592, %v588
    %v597 = vadd.s32 %v593, %v595
    %v598 = vadd.s32 %v597, %v587
    %v599 = vadd.s32 %v598, %v589
    %v600 = vand.u32 %v577, 65535
    %v601 = vshrl.u32 %v577, 16
    %v602 = vand.u32 %v572, 65535
    %v603 = vshrl.u32 %v572, 16
    %v604 = vmul.u32 %v600, %v602
    %v605 = vmul.u32 %v600, %v603
    %v606 = vmul.u32 %v601, %v602
    %v607 = vmul.u32 %v601, %v603
    %v608 = vshll.u32 %v605, 16
    %v609 = vshrl.u32 %v605, 16
    %v610 = vshll.u32 %v606, 16
    %v611 = vshrl.u32 %v606, 16
    %vm612 = vc.u32 %v604, %v608
    %v613 = vsel %vm612, 1, 0
    %v614 = vadd.s32 %v604, %v608
    %v615 = vadd.s32 %v607, %v613
    %vm616 = vc.u32 %v614, %v610
    %v617 = vsel %vm616, 1, 0
    %v618 = vadd.s32 %v614, %v610
    %v619 = vadd.s32 %v615, %v617
    %v620 = vadd.s32 %v619, %v609
    %v621 = vadd.s32 %v620, %v611
    %v622 = vmul.u32 %v577, %v568
    %v623 = vadd.s32 %v599, %v618
    %vm624 = vc.u32 %v599, %v618
    %v625 = vadd.s32 %v621, 1
    %v626 = vsel %vm624, %v625, %v621
    %v627 = vadd.s32 %v622, %v626
    %v628 = vadd.s32 %v627, 536870912
    %v629 = vshrl.u32 %v628, 30
    %v630 = vshll.u32 %v629, 30
    %v631 = vsub.s32 %v627, %v630
    %vm632 = vcmp.lt.s32.totalorder %v631, 0
    %v633 = vsub.s32 0, %v631
    %v634 = vsel %vm632, %v633, %v631
    %v635 = vclz %v634
    %v636 = vsub.s32 %v635, 2
    %vm637 = vcmp.gt.s32.totalorder 0, %v636
    %v638 = vsel %vm637, 0, %v636
    %v639 = vsub.s32 32, %v638
    %v640 = vshll.u32 %v631, %v638
    %v641 = vshrl.u32 %v623, %v639
    %v642 = vor.u32 %v640, %v641
    %v643 = vsub.s32 4294967266, %v638
    %v644 = vadd.s32 %v643, 127
    %v645 = vshll.u32 %v644, 23
    %v646 = vor.u32 4788187, %v645
    %v647 = vand.u32 2147483647, %v646
    %v649 = vcvt.s32.f32 %v642
    %v650 = vmul.f32 %v649, %v647
    %v651 = vxor.u32 %v650, 2147483648
    %v652 = vsel %vm531, %v651, %v650
    %v653 = vsub.s32 4, %v629
    %v654 = vsel %vm531, %v653, %v629
    %v655 = vsel %vm530, %v63, %v652
    %v656 = vsel %vm530, 0, %v654
    %v657 = vmul.f32 %v655, %v655
    %v658 = vmul.f32 %v657, -0.001358992
    %v659 = vadd.f32 %v658, 0.041655596
    %v660 = vmul.f32 %v657, %v659
    %v661 = vadd.f32 %v660, -0.4999988
    %v662 = vmul.f32 %v657, %v661
    %v663 = vadd.f32 1.0, %v662
    %v664 = vmul.f32 %v655, %v655
    %v665 = vmul.f32 %v664, -0.00019511016
    %v666 = vadd.f32 %v665, 0.008332121
    %v667 = vmul.f32 %v664, %v666
    %v668 = vadd.f32 %v667, -0.16666654
    %v669 = vmul.f32 %v664, %v668
    %v670 = vadd.f32 %v669, 1.0
    %v671 = vmul.f32 %v670, %v655
    %vm672 = vweird.f32 %v63
    %v673 = vadd.s32 %v656, 3
    %v674 = vand.u32 %v673, 3
    %vm675 = vcmp.lt.s32.totalorder %v674, 2
    %vm676 = vcmp.eq.s32.totalorder %v674, 0
    %v677 = vxor.u32 %v671, 2147483648
    %v678 = vsel %vm676, %v663, %v677
    %vm679 = vcmp.eq.s32.totalorder %v674, 2
    %v680 = vxor.u32 %v663, 2147483648
    %v681 = vsel %vm679, %v680, %v671
    %v682 = vsel %vm675, %v678, %v681
    %v683 = vsel %vm672, nan, %v682
    %684 = vst [vmem:[#allocation8] sm:$0xff] %v528
    %685 = vst [vmem:[#allocation8 + $0x8] sm:$0xff] %v683
    // Predicated region
    $region18: #{tpu_custom_call.1} parent=1 // pred_check
      _
    $region19: #{tpu_custom_call.1} parent=1 // pred_check_branch
      %687 = sbr.rel (0) target = $region21
    $region20: #{tpu_custom_call.1} parent=1 // pred_region
      %689 = vsyncadd [#allocation4], 0
      %s690 = sshll.u32 [#allocation7], 4
      %s691 = int_to_ptr.vmem [resolvable:$true] %s690
      %s692 = sshll.u32 %s2, 4
      %s693 = int_to_ptr.hbm [resolvable:$true] %s692
      %698 = dma.vmem_to_hbm [thread:$0]  %s691, 256, %s693, [#allocation4], 128, 128, 8
    $region21: #{tpu_custom_call.1} parent=1 // pred_fallthru
      _
    // Predicated region
    $region22: #{tpu_custom_call.1} parent=1 // pred_check
      _
    $region23: #{tpu_custom_call.1} parent=1 // pred_check_branch
      %700 = sbr.rel (0) target = $region25
    $region24: #{tpu_custom_call.1} parent=1 // pred_region
      %702 = vsyncadd [#allocation9], 0
      %s703 = sshll.u32 [#allocation8], 4
      %s704 = int_to_ptr.vmem [resolvable:$true] %s703
      %s705 = sshll.u32 %s3, 4
      %s706 = int_to_ptr.hbm [resolvable:$true] %s705
      %711 = dma.vmem_to_hbm [thread:$0]  %s704, 256, %s706, [#allocation9], 128, 128, 8
    $region25: #{tpu_custom_call.1} parent=1 // pred_fallthru
      _
    // Predicated region
    $region26: #{tpu_custom_call.1} parent=1 // pred_check
      _
    $region27: #{tpu_custom_call.1} parent=1 // pred_check_branch
      %713 = sbr.rel (0) target = $region29
    $region28: #{tpu_custom_call.1} parent=1 // pred_region
      %715 = dma.done [#allocation4], 256
    $region29: #{tpu_custom_call.1} parent=1 // pred_fallthru
      _
    // Predicated region
    $region30: #{tpu_custom_call.1} parent=1 // pred_check
      _
    $region31: #{tpu_custom_call.1} parent=1 // pred_check_branch
      %717 = sbr.rel (0) target = $region33
    $region32: #{tpu_custom_call.1} parent=1 // pred_region
      %719 = dma.done [#allocation9], 256
    $region33: #{tpu_custom_call.1} parent=1 // pred_fallthru
      _
    %720 = vsyncpa [#allocation3], 1
    %721 = vsyncpa [#allocation6], 1
    %722 = vsyncpa [#allocation4], 1
    %723 = vsyncpa [#allocation9], 1

</llo_original>
